<compile_context>
chip_gen: v5e
topology: v5e:2x2
jax: 0.10.0
libtpu: 0.0.40
codegen_flags: <defaults>
</compile_context>

<pallas_src>
import functools

import jax
import jax.numpy as jnp
from jax.experimental import pallas as pl
from jax.experimental.pallas import tpu as pltpu


# ----------------------------------------------------------------------------
# Pallas kernel: one (Nb, C, L) channel-first block per grid step, processed
# as a single concatenated (C, Nb*L) lane-dense slab.
# ----------------------------------------------------------------------------
def _conv_resblock_kernel(x_ref, s0_ref, t0_ref, w0_ref, b0_ref,
                          s1_ref, t1_ref, w1_ref, b1_ref, o_ref,
                          *, kernel_size, matmul_dtype):
    # x_ref / o_ref block: (Nb, C, L) channel-first; L on lanes, C on sublanes.
    # s*/t*/b*           : (C, 1) per-channel scale / shift / bias (f32).
    # w*                 : (C_out, K*C_in) fused-tap weights in matmul_dtype,
    #                      column k*C + c  ==  PyTorch weight[:, c, k].
    K = kernel_size
    pad_l = (K - 1) // 2
    nb, C, L = x_ref.shape
    NL = nb * L

    # ---- hoisted once per grid step (shared by both convs, all taps) ------
    # Lane position within each length-L segment of the concatenated slab;
    # the masks zero out tap contributions that would wrap across a batch
    # boundary (or the global edge), reproducing 'same' zero-padding.
    iota_cl = jax.lax.broadcasted_iota(jnp.int32, (C, L), 1)
    pos = jnp.concatenate([iota_cl] * nb, axis=1) if nb > 1 else iota_cl
    masks = []
    for k in range(K):
        d = k - pad_l                       # source offset along L for tap k
        if d == 0:
            masks.append(None)
        elif d > 0:
            masks.append(pos < (L - d))     # wrapped tail positions -> zero
        else:
            masks.append(pos >= (-d))       # wrapped head positions -> zero

    def bn_relu(h, s_ref, t_ref):
        # eval-mode BatchNorm folded to a per-channel affine, then ReLU (VPU).
        return jnp.maximum(h * s_ref[...] + t_ref[...], 0.0)

    def conv1d_same(h, w_ref, b_ref):
        # im2col via XLU lane-rotates + edge masks, then ONE MXU matmul for
        # the whole batch block:  (C_out, K*C) x (K*C, Nb*L).
        taps = []
        for k in range(K):
            d = k - pad_l
            if d == 0:
                taps.append(h)
            else:
                # rolled[c, j] = h[c, (j + d) mod NL]
                rolled = pltpu.roll(h, shift=(-d) % NL, axis=1)
                taps.append(jnp.where(masks[k], rolled, 0.0))
        him = jnp.concatenate(taps, axis=0).astype(matmul_dtype)   # (K*C, NL)
        out = jnp.dot(w_ref[...], him, preferred_element_type=jnp.float32)
        return out + b_ref[...]             # bias added once, after the matmul

    # Concatenate the batch block along lanes: one fat (C, Nb*L) slab.
    if nb > 1:
        xcat = jnp.concatenate([x_ref[b] for b in range(nb)], axis=1)
    else:
        xcat = x_ref[0]
    xcat = xcat.astype(jnp.float32)

    h = bn_relu(xcat, s0_ref, t0_ref)
    h = conv1d_same(h, w0_ref, b0_ref)
    h = bn_relu(h, s1_ref, t1_ref)
    # dropout: eval-mode identity
    h = conv1d_same(h, w1_ref, b1_ref)
    y = xcat + h                            # residual

    for b in range(nb):                     # static, lane-aligned slices
        o_ref[b] = y[:, b * L:(b + 1) * L].astype(o_ref.dtype)


# ----------------------------------------------------------------------------
# Wrapper: BN folding, weight fusing, batch blocking, pallas_call.
# ----------------------------------------------------------------------------
def _pick_batch_block(n, c, l, itemsize, max_block_bytes=4 << 20, max_unroll=16):
    """Largest divisor of n (capped) whose (nb, C, L) slab stays small."""
    nb = 1
    for cand in range(1, min(n, max_unroll) + 1):
        if n % cand == 0 and cand * c * l * itemsize <= max_block_bytes:
            nb = cand
    return nb


def conv_residual_block(x_ncl, params, eps=1e-3, matmul_dtype=None):
    """x_ncl: (N, C, L) float32, PyTorch nn.Conv1d layout.  Returns (N, C, L).

    matmul_dtype: dtype fed into the MXU dots (jnp.bfloat16 recommended on
    v5e/v6e/v7x).  Accumulation is always f32; BN/ReLU/residual stay f32.
    """
    N, C, L = x_ncl.shape
    K = params["w0"].shape[-1]
    if matmul_dtype is None:
        matmul_dtype = x_ncl.dtype

    # Fold eval-mode BatchNorm into per-channel scale/shift, shape (C, 1) so
    # it broadcasts along the lane (L) axis inside the kernel.
    def fold_bn(gamma, beta, mean, var):
        scale = (gamma / jnp.sqrt(var + eps)).astype(jnp.float32)
        shift = (beta - mean * scale).astype(jnp.float32)
        return scale.reshape(C, 1), shift.reshape(C, 1)

    s0, t0 = fold_bn(params["bn0_gamma"], params["bn0_beta"],
                     params["bn0_mean"], params["bn0_var"])
    s1, t1 = fold_bn(params["bn1_gamma"], params["bn1_beta"],
                     params["bn1_mean"], params["bn1_var"])

    # PyTorch conv weight (C_out, C_in, K) -> fused-tap (C_out, K*C_in),
    # column index k*C + c, matching the kernel's im2col row order.
    def fold_w(w):
        return jnp.transpose(w, (0, 2, 1)).reshape(C, K * C).astype(matmul_dtype)

    w0, w1 = fold_w(params["w0"]), fold_w(params["w1"])
    b0 = params["b0"].reshape(C, 1).astype(jnp.float32)
    b1 = params["b1"].reshape(C, 1).astype(jnp.float32)

    itemsize = jnp.dtype(x_ncl.dtype).itemsize
    nb = _pick_batch_block(N, C, L, itemsize)
    grid = (N // nb,)

    kernel = functools.partial(_conv_resblock_kernel,
                               kernel_size=K, matmul_dtype=matmul_dtype)

    x_spec = pl.BlockSpec((nb, C, L), lambda n: (n, 0, 0))
    vec_spec = pl.BlockSpec((C, 1), lambda n: (0, 0))
    w_spec = pl.BlockSpec((C, K * C), lambda n: (0, 0))

    # Explicit VMEM budget: double-buffered in/out blocks + f32 intermediates
    # (concatenated slab, im2col taps, activations) + weights, with headroom;
    # kept below v7x's 64 MiB physical VMEM.
    w_itemsize = jnp.dtype(matmul_dtype).itemsize
    block_bytes = nb * C * L * itemsize
    interm_bytes = nb * C * L * 4 * (2 * K + 6)
    weight_bytes = 2 * (C * K * C * w_itemsize + 3 * C * 4)
    vmem_limit = int(4 * block_bytes + interm_bytes + weight_bytes) + (2 << 20)
    vmem_limit = min(max(vmem_limit, 4 << 20), 64 << 20)

    return pl.pallas_call(
        kernel,
        out_shape=jax.ShapeDtypeStruct((N, C, L), x_ncl.dtype),
        grid=grid,
        in_specs=[x_spec,
                  vec_spec, vec_spec, w_spec, vec_spec,
                  vec_spec, vec_spec, w_spec, vec_spec],
        out_specs=x_spec,
        compiler_params=pltpu.CompilerParams(
            dimension_semantics=("parallel",),
            vmem_limit_bytes=vmem_limit),
    )(x_ncl, s0, t0, w0, b0, s1, t1, w1, b1)


# ----------------------------------------------------------------------------
# Pure-JAX reference (eval-mode PyTorch semantics) for verification.
# ----------------------------------------------------------------------------
def reference_forward(x, params, eps=1e-3):
    def bn(h, gamma, beta, mean, var):
        return ((h - mean[None, :, None]) / jnp.sqrt(var[None, :, None] + eps)
                ) * gamma[None, :, None] + beta[None, :, None]

    def conv1d_same(h, w, b):  # h (N,C,L), w (O,C,K), b (O,)
        K = w.shape[-1]
        pad_l = (K - 1) // 2
        pad_r = (K - 1) - pad_l
        hp = jnp.pad(h, ((0, 0), (0, 0), (pad_l, pad_r)))
        L = h.shape[-1]
        out = jnp.zeros((h.shape[0], w.shape[0], L), jnp.float32)
        for k in range(K):
            out = out + jnp.einsum("ncl,oc->nol", hp[:, :, k:k + L], w[:, :, k])
        return out + b[None, :, None]

    t = bn(x, params["bn0_gamma"], params["bn0_beta"],
           params["bn0_mean"], params["bn0_var"])
    t = jnp.maximum(t, 0.0)
    t = conv1d_same(t, params["w0"], params["b0"])
    t = bn(t, params["bn1_gamma"], params["bn1_beta"],
           params["bn1_mean"], params["bn1_var"])
    t = jnp.maximum(t, 0.0)
    t = conv1d_same(t, params["w1"], params["b1"])
    return x + t


# ----------------------------------------------------------------------------
if __name__ == "__main__":
    # Small but TPU-friendly shapes: L (lane axis) a multiple of 128,
    # C a multiple of 8 (sublanes).
    N, C, L, K = 4, 8, 128, 3

    key = jax.random.PRNGKey(0)
    keys = jax.random.split(key, 13)

    params = {
        # BatchNorm1d #0 (eval running stats + affine), eps=0.001 as in module
        "bn0_gamma": 1.0 + 0.1 * jax.random.normal(keys[0], (C,), jnp.float32),
        "bn0_beta": 0.1 * jax.random.normal(keys[1], (C,), jnp.float32),
        "bn0_mean": 0.1 * jax.random.normal(keys[2], (C,), jnp.float32),
        "bn0_var": 1.0 + 0.1 * jax.random.uniform(keys[3], (C,), jnp.float32),
        # Conv1d #0
        "w0": 0.3 * jax.random.normal(keys[4], (C, C, K), jnp.float32),
        "b0": 0.1 * jax.random.normal(keys[5], (C,), jnp.float32),
        # BatchNorm1d #1
        "bn1_gamma": 1.0 + 0.1 * jax.random.normal(keys[6], (C,), jnp.float32),
        "bn1_beta": 0.1 * jax.random.normal(keys[7], (C,), jnp.float32),
        "bn1_mean": 0.1 * jax.random.normal(keys[8], (C,), jnp.float32),
        "bn1_var": 1.0 + 0.1 * jax.random.uniform(keys[9], (C,), jnp.float32),
        # Conv1d #1: zero_initialization=True -> uniform(-0.001, 0.001)
        "w1": jax.random.uniform(keys[10], (C, C, K), jnp.float32,
                                 minval=-0.001, maxval=0.001),
        "b1": jax.random.uniform(keys[11], (C,), jnp.float32,
                                 minval=-0.001, maxval=0.001),
    }

    x = jax.random.normal(keys[12], (N, C, L), jnp.float32)

    ref = jax.block_until_ready(reference_forward(x, params))

    # Exact path (f32 into the MXU) — matches module numerics tightly.
    out_f32 = jax.block_until_ready(conv_residual_block(x, params))
    assert out_f32.shape == (N, C, L)
    err32 = jnp.max(jnp.abs(out_f32 - ref))
    assert jnp.allclose(out_f32, ref, atol=1e-5, rtol=1e-5), (
        f"f32 path max abs err {err32}")

    # bf16-into-MXU path: bf16 dot inputs, f32 accumulation, f32 VPU math —
    # looser tolerance due to bf16 mantissa.
    out_bf16 = jax.block_until_ready(
        conv_residual_block(x, params, matmul_dtype=jnp.bfloat16))
    errbf = jnp.max(jnp.abs(out_bf16 - ref))
    assert jnp.allclose(out_bf16, ref, atol=1e-2, rtol=1e-2), (
        f"bf16 path max abs err {errbf}")

    print("KERNEL_OK")
</pallas_src>

<mosaic_0001>
module attributes {stable_mosaic.version = 11 : i64} {
  func.func @_conv_resblock_kernel(%arg0: i32, %arg1: memref<4x8x128xf32, #tpu.memory_space<vmem>>, %arg2: memref<8x1xf32, #tpu.memory_space<vmem>>, %arg3: memref<8x1xf32, #tpu.memory_space<vmem>>, %arg4: memref<8x24xf32, #tpu.memory_space<vmem>>, %arg5: memref<8x1xf32, #tpu.memory_space<vmem>>, %arg6: memref<8x1xf32, #tpu.memory_space<vmem>>, %arg7: memref<8x1xf32, #tpu.memory_space<vmem>>, %arg8: memref<8x24xf32, #tpu.memory_space<vmem>>, %arg9: memref<8x1xf32, #tpu.memory_space<vmem>>, %arg10: memref<4x8x128xf32, #tpu.memory_space<vmem>>) attributes {dimension_semantics = [#tpu.dimension_semantics<parallel>], iteration_bounds = array<i64: 1>, scalar_prefetch = 0 : i64, scratch_operands = 0 : i64, tpu.core_type = #tpu.core_type<tc>, window_params = [{transform_indices = @transform_0, window_bounds = array<i64: 4, 8, 128>}, {pipeline_mode = #tpu.pipeline_mode<synchronous>, transform_indices = @transform_1, window_bounds = array<i64: 8, 1>}, {pipeline_mode = #tpu.pipeline_mode<synchronous>, transform_indices = @transform_2, window_bounds = array<i64: 8, 1>}, {pipeline_mode = #tpu.pipeline_mode<synchronous>, transform_indices = @transform_3, window_bounds = array<i64: 8, 24>}, {pipeline_mode = #tpu.pipeline_mode<synchronous>, transform_indices = @transform_4, window_bounds = array<i64: 8, 1>}, {pipeline_mode = #tpu.pipeline_mode<synchronous>, transform_indices = @transform_5, window_bounds = array<i64: 8, 1>}, {pipeline_mode = #tpu.pipeline_mode<synchronous>, transform_indices = @transform_6, window_bounds = array<i64: 8, 1>}, {pipeline_mode = #tpu.pipeline_mode<synchronous>, transform_indices = @transform_7, window_bounds = array<i64: 8, 24>}, {pipeline_mode = #tpu.pipeline_mode<synchronous>, transform_indices = @transform_8, window_bounds = array<i64: 8, 1>}, {transform_indices = @transform_9, window_bounds = array<i64: 4, 8, 128>}]} {
    %0 = tpu.iota {dimensions = array<i32: 1>} : vector<8x128xi32>
    %1 = tpu.concatenate %0, %0, %0, %0 in 1 : vector<8x128xi32>, vector<8x128xi32>, vector<8x128xi32>, vector<8x128xi32> -> vector<8x512xi32>
    %c1_i32 = arith.constant 1 : i32
    %2 = vector.broadcast %c1_i32 : i32 to vector<8x512xi32>
    %3 = arith.cmpi sge, %1, %2 : vector<8x512xi32>
    %c127_i32 = arith.constant 127 : i32
    %4 = vector.broadcast %c127_i32 : i32 to vector<8x512xi32>
    %5 = arith.cmpi slt, %1, %4 : vector<8x512xi32>
    %c0 = arith.constant 0 : index
    %c0_0 = arith.constant 0 : index
    %c0_1 = arith.constant 0 : index
    %6 = vector.load %arg1[%c0, %c0_0, %c0_1] : memref<4x8x128xf32, #tpu.memory_space<vmem>>, vector<1x8x128xf32>
    %7 = vector.shape_cast %6 : vector<1x8x128xf32> to vector<8x128xf32>
    %c1 = arith.constant 1 : index
    %c0_2 = arith.constant 0 : index
    %c0_3 = arith.constant 0 : index
    %8 = vector.load %arg1[%c1, %c0_2, %c0_3] : memref<4x8x128xf32, #tpu.memory_space<vmem>>, vector<1x8x128xf32>
    %9 = vector.shape_cast %8 : vector<1x8x128xf32> to vector<8x128xf32>
    %c2 = arith.constant 2 : index
    %c0_4 = arith.constant 0 : index
    %c0_5 = arith.constant 0 : index
    %10 = vector.load %arg1[%c2, %c0_4, %c0_5] : memref<4x8x128xf32, #tpu.memory_space<vmem>>, vector<1x8x128xf32>
    %11 = vector.shape_cast %10 : vector<1x8x128xf32> to vector<8x128xf32>
    %c3 = arith.constant 3 : index
    %c0_6 = arith.constant 0 : index
    %c0_7 = arith.constant 0 : index
    %12 = vector.load %arg1[%c3, %c0_6, %c0_7] : memref<4x8x128xf32, #tpu.memory_space<vmem>>, vector<1x8x128xf32>
    %13 = vector.shape_cast %12 : vector<1x8x128xf32> to vector<8x128xf32>
    %14 = tpu.concatenate %7, %9, %11, %13 in 1 : vector<8x128xf32>, vector<8x128xf32>, vector<8x128xf32>, vector<8x128xf32> -> vector<8x512xf32>
    %c0_8 = arith.constant 0 : index
    %c0_9 = arith.constant 0 : index
    %15 = vector.load %arg2[%c0_8, %c0_9] : memref<8x1xf32, #tpu.memory_space<vmem>>, vector<8x1xf32>
    %16 = vector.broadcast %15 : vector<8x1xf32> to vector<8x512xf32>
    %17 = arith.mulf %14, %16 : vector<8x512xf32>
    %c0_10 = arith.constant 0 : index
    %c0_11 = arith.constant 0 : index
    %18 = vector.load %arg3[%c0_10, %c0_11] : memref<8x1xf32, #tpu.memory_space<vmem>>, vector<8x1xf32>
    %19 = vector.broadcast %18 : vector<8x1xf32> to vector<8x512xf32>
    %20 = arith.addf %17, %19 : vector<8x512xf32>
    %cst = arith.constant 0.000000e+00 : f32
    %21 = vector.broadcast %cst : f32 to vector<8x512xf32>
    %22 = arith.maximumf %20, %21 : vector<8x512xf32>
    %c1_i32_12 = arith.constant 1 : i32
    %23 = tpu.dynamic_rotate %22 by %c1_i32_12 dim 1 : vector<8x512xf32>, i32 -> vector<8x512xf32>
    %cst_13 = arith.constant 0.000000e+00 : f32
    %24 = vector.broadcast %cst_13 : f32 to vector<8x512xf32>
    %25 = arith.select %3, %23, %24 : vector<8x512xi1>, vector<8x512xf32>
    %c511_i32 = arith.constant 511 : i32
    %26 = tpu.dynamic_rotate %22 by %c511_i32 dim 1 : vector<8x512xf32>, i32 -> vector<8x512xf32>
    %cst_14 = arith.constant 0.000000e+00 : f32
    %27 = vector.broadcast %cst_14 : f32 to vector<8x512xf32>
    %28 = arith.select %5, %26, %27 : vector<8x512xi1>, vector<8x512xf32>
    %29 = tpu.concatenate %25, %22, %28 in 0 : vector<8x512xf32>, vector<8x512xf32>, vector<8x512xf32> -> vector<24x512xf32>
    %c0_15 = arith.constant 0 : index
    %c0_16 = arith.constant 0 : index
    %30 = vector.load %arg4[%c0_15, %c0_16] : memref<8x24xf32, #tpu.memory_space<vmem>>, vector<8x24xf32>
    %cst_17 = arith.constant dense<0.000000e+00> : vector<8x512xf32>
    %31 = tpu.matmul %30, %29, %cst_17 {dimension_numbers = #tpu.dot_dimension_numbers<[1], [0], [0], [1], [0, 0, 1, 1], [], []>} : vector<8x24xf32>, vector<24x512xf32>, vector<8x512xf32> -> vector<8x512xf32>
    %c0_18 = arith.constant 0 : index
    %c0_19 = arith.constant 0 : index
    %32 = vector.load %arg5[%c0_18, %c0_19] : memref<8x1xf32, #tpu.memory_space<vmem>>, vector<8x1xf32>
    %33 = vector.broadcast %32 : vector<8x1xf32> to vector<8x512xf32>
    %34 = arith.addf %31, %33 : vector<8x512xf32>
    %c0_20 = arith.constant 0 : index
    %c0_21 = arith.constant 0 : index
    %35 = vector.load %arg6[%c0_20, %c0_21] : memref<8x1xf32, #tpu.memory_space<vmem>>, vector<8x1xf32>
    %36 = vector.broadcast %35 : vector<8x1xf32> to vector<8x512xf32>
    %37 = arith.mulf %34, %36 : vector<8x512xf32>
    %c0_22 = arith.constant 0 : index
    %c0_23 = arith.constant 0 : index
    %38 = vector.load %arg7[%c0_22, %c0_23] : memref<8x1xf32, #tpu.memory_space<vmem>>, vector<8x1xf32>
    %39 = vector.broadcast %38 : vector<8x1xf32> to vector<8x512xf32>
    %40 = arith.addf %37, %39 : vector<8x512xf32>
    %cst_24 = arith.constant 0.000000e+00 : f32
    %41 = vector.broadcast %cst_24 : f32 to vector<8x512xf32>
    %42 = arith.maximumf %40, %41 : vector<8x512xf32>
    %c1_i32_25 = arith.constant 1 : i32
    %43 = tpu.dynamic_rotate %42 by %c1_i32_25 dim 1 : vector<8x512xf32>, i32 -> vector<8x512xf32>
    %cst_26 = arith.constant 0.000000e+00 : f32
    %44 = vector.broadcast %cst_26 : f32 to vector<8x512xf32>
    %45 = arith.select %3, %43, %44 : vector<8x512xi1>, vector<8x512xf32>
    %c511_i32_27 = arith.constant 511 : i32
    %46 = tpu.dynamic_rotate %42 by %c511_i32_27 dim 1 : vector<8x512xf32>, i32 -> vector<8x512xf32>
    %cst_28 = arith.constant 0.000000e+00 : f32
    %47 = vector.broadcast %cst_28 : f32 to vector<8x512xf32>
    %48 = arith.select %5, %46, %47 : vector<8x512xi1>, vector<8x512xf32>
    %49 = tpu.concatenate %45, %42, %48 in 0 : vector<8x512xf32>, vector<8x512xf32>, vector<8x512xf32> -> vector<24x512xf32>
    %c0_29 = arith.constant 0 : index
    %c0_30 = arith.constant 0 : index
    %50 = vector.load %arg8[%c0_29, %c0_30] : memref<8x24xf32, #tpu.memory_space<vmem>>, vector<8x24xf32>
    %cst_31 = arith.constant dense<0.000000e+00> : vector<8x512xf32>
    %51 = tpu.matmul %50, %49, %cst_31 {dimension_numbers = #tpu.dot_dimension_numbers<[1], [0], [0], [1], [0, 0, 1, 1], [], []>} : vector<8x24xf32>, vector<24x512xf32>, vector<8x512xf32> -> vector<8x512xf32>
    %c0_32 = arith.constant 0 : index
    %c0_33 = arith.constant 0 : index
    %52 = vector.load %arg9[%c0_32, %c0_33] : memref<8x1xf32, #tpu.memory_space<vmem>>, vector<8x1xf32>
    %53 = vector.broadcast %52 : vector<8x1xf32> to vector<8x512xf32>
    %54 = arith.addf %51, %53 : vector<8x512xf32>
    %55 = arith.addf %14, %54 : vector<8x512xf32>
    %56 = vector.extract_strided_slice %55 {offsets = [0, 0], sizes = [8, 128], strides = [1, 1]} : vector<8x512xf32> to vector<8x128xf32>
    %c0_34 = arith.constant 0 : index
    %c0_35 = arith.constant 0 : index
    %c0_36 = arith.constant 0 : index
    %57 = vector.load %arg10[%c0_34, %c0_35, %c0_36] : memref<4x8x128xf32, #tpu.memory_space<vmem>>, vector<1x8x128xf32>
    %58 = vector.shape_cast %57 : vector<1x8x128xf32> to vector<8x128xf32>
    %59 = vector.shape_cast %56 : vector<8x128xf32> to vector<1x8x128xf32>
    tpu.vector_store %arg10[%c0_34, %c0_35, %c0_36], %59 {strides = array<i32>} : memref<4x8x128xf32, #tpu.memory_space<vmem>>, vector<1x8x128xf32>,
    %60 = vector.extract_strided_slice %55 {offsets = [0, 128], sizes = [8, 128], strides = [1, 1]} : vector<8x512xf32> to vector<8x128xf32>
    %c1_37 = arith.constant 1 : index
    %c0_38 = arith.constant 0 : index
    %c0_39 = arith.constant 0 : index
    %61 = vector.load %arg10[%c1_37, %c0_38, %c0_39] : memref<4x8x128xf32, #tpu.memory_space<vmem>>, vector<1x8x128xf32>
    %62 = vector.shape_cast %61 : vector<1x8x128xf32> to vector<8x128xf32>
    %63 = vector.shape_cast %60 : vector<8x128xf32> to vector<1x8x128xf32>
    tpu.vector_store %arg10[%c1_37, %c0_38, %c0_39], %63 {strides = array<i32>} : memref<4x8x128xf32, #tpu.memory_space<vmem>>, vector<1x8x128xf32>,
    %64 = vector.extract_strided_slice %55 {offsets = [0, 256], sizes = [8, 128], strides = [1, 1]} : vector<8x512xf32> to vector<8x128xf32>
    %c2_40 = arith.constant 2 : index
    %c0_41 = arith.constant 0 : index
    %c0_42 = arith.constant 0 : index
    %65 = vector.load %arg10[%c2_40, %c0_41, %c0_42] : memref<4x8x128xf32, #tpu.memory_space<vmem>>, vector<1x8x128xf32>
    %66 = vector.shape_cast %65 : vector<1x8x128xf32> to vector<8x128xf32>
    %67 = vector.shape_cast %64 : vector<8x128xf32> to vector<1x8x128xf32>
    tpu.vector_store %arg10[%c2_40, %c0_41, %c0_42], %67 {strides = array<i32>} : memref<4x8x128xf32, #tpu.memory_space<vmem>>, vector<1x8x128xf32>,
    %68 = vector.extract_strided_slice %55 {offsets = [0, 384], sizes = [8, 128], strides = [1, 1]} : vector<8x512xf32> to vector<8x128xf32>
    %c3_43 = arith.constant 3 : index
    %c0_44 = arith.constant 0 : index
    %c0_45 = arith.constant 0 : index
    %69 = vector.load %arg10[%c3_43, %c0_44, %c0_45] : memref<4x8x128xf32, #tpu.memory_space<vmem>>, vector<1x8x128xf32>
    %70 = vector.shape_cast %69 : vector<1x8x128xf32> to vector<8x128xf32>
    %71 = vector.shape_cast %68 : vector<8x128xf32> to vector<1x8x128xf32>
    tpu.vector_store %arg10[%c3_43, %c0_44, %c0_45], %71 {strides = array<i32>} : memref<4x8x128xf32, #tpu.memory_space<vmem>>, vector<1x8x128xf32>,
    return
  }
  func.func @transform_0(%arg0: i32) -> (i32, i32, i32) {
    %c0_i32 = arith.constant 0 : i32
    %c0_i32_0 = arith.constant 0 : i32
    %c0_i32_1 = arith.constant 0 : i32
    return %arg0, %c0_i32, %c0_i32_0 : i32, i32, i32
  }
  func.func @transform_1(%arg0: i32) -> (i32, i32) {
    %c0_i32 = arith.constant 0 : i32
    %c0_i32_0 = arith.constant 0 : i32
    %c0_i32_1 = arith.constant 0 : i32
    return %c0_i32, %c0_i32_0 : i32, i32
  }
  func.func @transform_2(%arg0: i32) -> (i32, i32) {
    %c0_i32 = arith.constant 0 : i32
    %c0_i32_0 = arith.constant 0 : i32
    %c0_i32_1 = arith.constant 0 : i32
    return %c0_i32, %c0_i32_0 : i32, i32
  }
  func.func @transform_3(%arg0: i32) -> (i32, i32) {
    %c0_i32 = arith.constant 0 : i32
    %c0_i32_0 = arith.constant 0 : i32
    %c0_i32_1 = arith.constant 0 : i32
    return %c0_i32, %c0_i32_0 : i32, i32
  }
  func.func @transform_4(%arg0: i32) -> (i32, i32) {
    %c0_i32 = arith.constant 0 : i32
    %c0_i32_0 = arith.constant 0 : i32
    %c0_i32_1 = arith.constant 0 : i32
    return %c0_i32, %c0_i32_0 : i32, i32
  }
  func.func @transform_5(%arg0: i32) -> (i32, i32) {
    %c0_i32 = arith.constant 0 : i32
    %c0_i32_0 = arith.constant 0 : i32
    %c0_i32_1 = arith.constant 0 : i32
    return %c0_i32, %c0_i32_0 : i32, i32
  }
  func.func @transform_6(%arg0: i32) -> (i32, i32) {
    %c0_i32 = arith.constant 0 : i32
    %c0_i32_0 = arith.constant 0 : i32
    %c0_i32_1 = arith.constant 0 : i32
    return %c0_i32, %c0_i32_0 : i32, i32
  }
  func.func @transform_7(%arg0: i32) -> (i32, i32) {
    %c0_i32 = arith.constant 0 : i32
    %c0_i32_0 = arith.constant 0 : i32
    %c0_i32_1 = arith.constant 0 : i32
    return %c0_i32, %c0_i32_0 : i32, i32
  }
  func.func @transform_8(%arg0: i32) -> (i32, i32) {
    %c0_i32 = arith.constant 0 : i32
    %c0_i32_0 = arith.constant 0 : i32
    %c0_i32_1 = arith.constant 0 : i32
    return %c0_i32, %c0_i32_0 : i32, i32
  }
  func.func @transform_9(%arg0: i32) -> (i32, i32, i32) {
    %c0_i32 = arith.constant 0 : i32
    %c0_i32_0 = arith.constant 0 : i32
    %c0_i32_1 = arith.constant 0 : i32
    return %arg0, %c0_i32, %c0_i32_0 : i32, i32, i32
  }
}

</mosaic_0001>

<llo_original>
// kernel: tpu_custom_call.1
$region0: #{tpu_custom_call.1}
  #allocation0 [shape = 'u32[]', space=smem, size = 0x4, offset = 0x4, fixed_abs, tag = 'smem constant byte address 0x4 - core index']
  #allocation1 [shape = 'u32[72,128]{1,0:T(1,128)}', space=vmem, size = 0x9000, scoped, tag = 'internal scratch']
  %s0 = inlined_call_operand.hbm [shape: f32[4,8,128], index: 0, kind: input, shape index: {}]
  %s1 = inlined_call_operand.vmem [shape: f32[8,1], index: 1, kind: input, shape index: {}]
  %s2 = inlined_call_operand.vmem [shape: f32[8,1], index: 2, kind: input, shape index: {}]
  %s3 = inlined_call_operand.vmem [shape: f32[8,24], index: 3, kind: input, shape index: {}]
  %s4 = inlined_call_operand.vmem [shape: f32[8,1], index: 4, kind: input, shape index: {}]
  %s5 = inlined_call_operand.vmem [shape: f32[8,1], index: 5, kind: input, shape index: {}]
  %s6 = inlined_call_operand.vmem [shape: f32[8,1], index: 6, kind: input, shape index: {}]
  %s7 = inlined_call_operand.vmem [shape: f32[8,24], index: 7, kind: input, shape index: {}]
  %s8 = inlined_call_operand.vmem [shape: f32[8,1], index: 8, kind: input, shape index: {}]
  %s9 = inlined_call_operand.hbm [shape: f32[4,8,128], index: 9, kind: output, shape index: {}]
  %s10 = sld [smem:[#allocation0]]
  $region50: #{tpu_custom_call.1} parent=0
    _
  %s12 = ssub.s32 1, %s10
  %s13 = scalar_select 0, %s12, %s10
  $region1: #{tpu_custom_call.1} parent=0
    #allocation2 [shape = 'u8[16384]{0}', space=vmem, size = 0x4000, scoped, tag = 'input window, operand 0, single buffered']
    #allocation3 [shape = 's32[1]{0}', space=sflag, size = 0x4, scoped, tag = 'scoped memory for tpu_custom_call.1']
    #allocation4 [shape = 's32[1]{0}', space=sflag, size = 0x4, scoped, tag = 'scoped memory for tpu_custom_call.1']
    #allocation5 [shape = 'u8[16384]{0}', space=vmem, size = 0x4000, scoped, tag = 'output window, operand 0, single buffered']
    %14 = vsyncpa [#allocation3], 0
    %15 = vsyncpa [#allocation4], 0
    // Predicated region
    $region2: #{tpu_custom_call.1} parent=1 // pred_check
      _
    $region3: #{tpu_custom_call.1} parent=1 // pred_check_branch
      %17 = sbr.rel (0) target = $region5
    $region4: #{tpu_custom_call.1} parent=1 // pred_region
      %19 = vsyncadd [#allocation3], 0
      %s20 = sshll.u32 %s0, 4
      %s21 = int_to_ptr.hbm [resolvable:$true] %s20
      %s22 = sshll.u32 [#allocation2], 4
      %s23 = int_to_ptr.vmem [resolvable:$true] %s22
      %28 = dma.hbm_to_vmem [thread:$0]  %s21, 512, %s23, [#allocation3], 128, 128, 8
    $region5: #{tpu_custom_call.1} parent=1 // pred_fallthru
      _
    // Predicated region
    $region6: #{tpu_custom_call.1} parent=1 // pred_check
      _
    $region7: #{tpu_custom_call.1} parent=1 // pred_check_branch
      %30 = sbr.rel (0) target = $region9
    $region8: #{tpu_custom_call.1} parent=1 // pred_region
      _
    $region9: #{tpu_custom_call.1} parent=1 // pred_fallthru
      _
    // Predicated region
    $region10: #{tpu_custom_call.1} parent=1 // pred_check
      _
    $region11: #{tpu_custom_call.1} parent=1 // pred_check_branch
      %32 = sbr.rel (0) target = $region13
    $region12: #{tpu_custom_call.1} parent=1 // pred_region
      _
    $region13: #{tpu_custom_call.1} parent=1 // pred_fallthru
      _
    // Predicated region
    $region14: #{tpu_custom_call.1} parent=1 // pred_check
      _
    $region15: #{tpu_custom_call.1} parent=1 // pred_check_branch
      %34 = sbr.rel (0) target = $region17
    $region16: #{tpu_custom_call.1} parent=1 // pred_region
      _
    $region17: #{tpu_custom_call.1} parent=1 // pred_fallthru
      _
    // Predicated region
    $region18: #{tpu_custom_call.1} parent=1 // pred_check
      _
    $region19: #{tpu_custom_call.1} parent=1 // pred_check_branch
      %36 = sbr.rel (0) target = $region21
    $region20: #{tpu_custom_call.1} parent=1 // pred_region
      _
    $region21: #{tpu_custom_call.1} parent=1 // pred_fallthru
      _
    // Predicated region
    $region22: #{tpu_custom_call.1} parent=1 // pred_check
      _
    $region23: #{tpu_custom_call.1} parent=1 // pred_check_branch
      %38 = sbr.rel (0) target = $region25
    $region24: #{tpu_custom_call.1} parent=1 // pred_region
      _
    $region25: #{tpu_custom_call.1} parent=1 // pred_fallthru
      _
    // Predicated region
    $region26: #{tpu_custom_call.1} parent=1 // pred_check
      _
    $region27: #{tpu_custom_call.1} parent=1 // pred_check_branch
      %40 = sbr.rel (0) target = $region29
    $region28: #{tpu_custom_call.1} parent=1 // pred_region
      _
    $region29: #{tpu_custom_call.1} parent=1 // pred_fallthru
      _
    // Predicated region
    $region30: #{tpu_custom_call.1} parent=1 // pred_check
      _
    $region31: #{tpu_custom_call.1} parent=1 // pred_check_branch
      %42 = sbr.rel (0) target = $region33
    $region32: #{tpu_custom_call.1} parent=1 // pred_region
      _
    $region33: #{tpu_custom_call.1} parent=1 // pred_fallthru
      _
    // Predicated region
    $region34: #{tpu_custom_call.1} parent=1 // pred_check
      _
    $region35: #{tpu_custom_call.1} parent=1 // pred_check_branch
      %44 = sbr.rel (0) target = $region37
    $region36: #{tpu_custom_call.1} parent=1 // pred_region
      _
    $region37: #{tpu_custom_call.1} parent=1 // pred_fallthru
      _
    // Predicated region
    $region38: #{tpu_custom_call.1} parent=1 // pred_check
      _
    $region39: #{tpu_custom_call.1} parent=1 // pred_check_branch
      %46 = sbr.rel (0) target = $region41
    $region40: #{tpu_custom_call.1} parent=1 // pred_region
      %48 = dma.done [#allocation3], 512
    $region41: #{tpu_custom_call.1} parent=1 // pred_fallthru
      _
    %v49 = vlaneseq
    %v50 = vand.u32 %v49, 127
    %vm51 = vcmp.ge.s32.totalorder %v50, 1
    %vm52 = vcmp.lt.s32.totalorder %v50, 127
    %v53 = vld [vmem:[#allocation2] sm:$0xff]
    %s54 = scalar_lea.vmem [#allocation2], 8
    %v55 = vld [vmem:[%s54] sm:$0xff]
    %s56 = scalar_lea.vmem [#allocation2], 16
    %v57 = vld [vmem:[%s56] sm:$0xff]
    %s58 = scalar_lea.vmem [#allocation2], 24
    %v59 = vld [vmem:[%s58] sm:$0xff]
    %v60 = vld [vmem:[%s1] sm:$0xff]
    %62 = vset.pattern.permute.xlu0 0
    %63 = vperm.xlu0 %62, %v60
    %v64 = vpop.permute.xlu0 %63
    %v66 = vmul.f32 %v53, %v64
    %v67 = vmul.f32 %v55, %v64
    %v68 = vmul.f32 %v57, %v64
    %v69 = vmul.f32 %v59, %v64
    %v70 = vld [vmem:[%s2] sm:$0xff]
    %72 = vset.pattern.permute.xlu0 0
    %73 = vperm.xlu0 %72, %v70
    %v74 = vpop.permute.xlu0 %73
    %v76 = vadd.f32 %v66, %v74
    %v77 = vadd.f32 %v67, %v74
    %v78 = vadd.f32 %v68, %v74
    %v79 = vadd.f32 %v69, %v74
    %v80 = vmax.f32 %v76, 0.0
    %v81 = vmax.f32 %v77, 0.0
    %v82 = vmax.f32 %v78, 0.0
    %v83 = vmax.f32 %v79, 0.0
    %84 = vrot.lane.b32.xlu0 %v80, 1
    %v85 = vpop.permute.xlu0 %84
    %86 = vrot.lane.b32.xlu0 %v81, 1
    %v87 = vpop.permute.xlu0 %86
    %88 = vrot.lane.b32.xlu0 %v82, 1
    %v89 = vpop.permute.xlu0 %88
    %90 = vrot.lane.b32.xlu0 %v83, 1
    %v91 = vpop.permute.xlu0 %90
    %vm92 = vcmp.lt.s32.totalorder %v50, 1
    %v93 = vsel %vm92, %v89, %v91
    %v94 = vsel %vm92, %v87, %v89
    %v95 = vsel %vm92, %v85, %v87
    %v96 = vsel %vm92, %v91, %v85
    %v97 = vsel %vm51, %v96, 0.0
    %v98 = vsel %vm51, %v95, 0.0
    %v99 = vsel %vm51, %v94, 0.0
    %v100 = vsel %vm51, %v93, 0.0
    %101 = vrot.lane.b32.xlu0 %v80, 127
    %v102 = vpop.permute.xlu0 %101
    %103 = vrot.lane.b32.xlu0 %v81, 127
    %v104 = vpop.permute.xlu0 %103
    %105 = vrot.lane.b32.xlu0 %v82, 127
    %v106 = vpop.permute.xlu0 %105
    %107 = vrot.lane.b32.xlu0 %v83, 127
    %v108 = vpop.permute.xlu0 %107
    %v109 = vsel %vm52, %v106, %v108
    %v110 = vsel %vm52, %v104, %v106
    %v111 = vsel %vm52, %v102, %v104
    %v112 = vsel %vm52, %v108, %v102
    %v113 = vsel %vm52, %v111, 0.0
    %v114 = vsel %vm52, %v110, 0.0
    %v115 = vsel %vm52, %v109, 0.0
    %v116 = vsel %vm52, %v112, 0.0
    %v117 = vld [vmem:[%s3] sm:$0xff]
    %v118 = vld [vmem:[%s4] sm:$0xff]
    %120 = vset.pattern.permute.xlu0 0
    %121 = vperm.xlu0 %120, %v118
    %v122 = vpop.permute.xlu0 %121
    %vm124 = vcmask 195584
    %v126 = vsel %vm124, %v117, 0
    %128 = vmatpush.msra.mxu0 0.0
    %129 = vmatpush.msra.mxu0 0.0
    %130 = vmatpush.msra.mxu0 0.0
    %131 = vmatpush.msra.mxu0 0.0
    %132 = vmatpush.msra.mxu0 0.0
    %133 = vmatpush.msra.mxu0 0.0
    %134 = vmatpush.msra.mxu0 0.0
    %135 = vmatpush.msra.mxu0 0.0
    %136 = vmatpush.msra.mxu0 0.0
    %137 = vmatpush.msra.mxu0 0.0
    %138 = vmatpush.msra.mxu0 0.0
    %139 = vmatpush.msra.mxu0 0.0
    %140 = vmatpush.msra.mxu0 0.0
    %141 = vmatpush.msra.mxu0 %v113
    %142 = vmatpush.msra.mxu0 %v80
    %143 = vmatpush.msra.mxu0 %v97
    %144 = vmatmul.f32.gmra.mxu0 %v126
    %v145 = vpop.f32.mrf.mxu0
    %v146 = vadd.f32 %v122, %v145
    %147 = vdwg.mxu0
    %148 = vmatpush.msra.mxu0 0.0
    %149 = vmatpush.msra.mxu0 0.0
    %150 = vmatpush.msra.mxu0 0.0
    %151 = vmatpush.msra.mxu0 0.0
    %152 = vmatpush.msra.mxu0 0.0
    %153 = vmatpush.msra.mxu0 0.0
    %154 = vmatpush.msra.mxu0 0.0
    %155 = vmatpush.msra.mxu0 0.0
    %156 = vmatpush.msra.mxu0 0.0
    %157 = vmatpush.msra.mxu0 0.0
    %158 = vmatpush.msra.mxu0 0.0
    %159 = vmatpush.msra.mxu0 0.0
    %160 = vmatpush.msra.mxu0 0.0
    %161 = vmatpush.msra.mxu0 %v114
    %162 = vmatpush.msra.mxu0 %v81
    %163 = vmatpush.msra.mxu0 %v98
    %164 = vmatmul.f32.gmra.mxu0 %v126
    %v165 = vpop.f32.mrf.mxu0
    %v166 = vadd.f32 %v122, %v165
    %167 = vdwg.mxu0
    %168 = vmatpush.msra.mxu0 0.0
    %169 = vmatpush.msra.mxu0 0.0
    %170 = vmatpush.msra.mxu0 0.0
    %171 = vmatpush.msra.mxu0 0.0
    %172 = vmatpush.msra.mxu0 0.0
    %173 = vmatpush.msra.mxu0 0.0
    %174 = vmatpush.msra.mxu0 0.0
    %175 = vmatpush.msra.mxu0 0.0
    %176 = vmatpush.msra.mxu0 0.0
    %177 = vmatpush.msra.mxu0 0.0
    %178 = vmatpush.msra.mxu0 0.0
    %179 = vmatpush.msra.mxu0 0.0
    %180 = vmatpush.msra.mxu0 0.0
    %181 = vmatpush.msra.mxu0 %v115
    %182 = vmatpush.msra.mxu0 %v82
    %183 = vmatpush.msra.mxu0 %v99
    %184 = vmatmul.f32.gmra.mxu0 %v126
    %v185 = vpop.f32.mrf.mxu0
    %v186 = vadd.f32 %v122, %v185
    %187 = vdwg.mxu0
    %188 = vmatpush.msra.mxu0 0.0
    %189 = vmatpush.msra.mxu0 0.0
    %190 = vmatpush.msra.mxu0 0.0
    %191 = vmatpush.msra.mxu0 0.0
    %192 = vmatpush.msra.mxu0 0.0
    %193 = vmatpush.msra.mxu0 0.0
    %194 = vmatpush.msra.mxu0 0.0
    %195 = vmatpush.msra.mxu0 0.0
    %196 = vmatpush.msra.mxu0 0.0
    %197 = vmatpush.msra.mxu0 0.0
    %198 = vmatpush.msra.mxu0 0.0
    %199 = vmatpush.msra.mxu0 0.0
    %200 = vmatpush.msra.mxu0 0.0
    %201 = vmatpush.msra.mxu0 %v116
    %202 = vmatpush.msra.mxu0 %v83
    %203 = vmatpush.msra.mxu0 %v100
    %204 = vmatmul.f32.gmra.mxu0 %v126
    %v205 = vpop.f32.mrf.mxu0
    %v206 = vadd.f32 %v122, %v205
    %207 = vdwg.mxu0
    %v208 = vld [vmem:[%s5] sm:$0xff]
    %210 = vset.pattern.permute.xlu0 0
    %211 = vperm.xlu0 %210, %v208
    %v212 = vpop.permute.xlu0 %211
    %v214 = vmul.f32 %v146, %v212
    %v215 = vmul.f32 %v166, %v212
    %v216 = vmul.f32 %v186, %v212
    %v217 = vmul.f32 %v206, %v212
    %v218 = vld [vmem:[%s6] sm:$0xff]
    %220 = vset.pattern.permute.xlu0 0
    %221 = vperm.xlu0 %220, %v218
    %v222 = vpop.permute.xlu0 %221
    %v224 = vadd.f32 %v214, %v222
    %v225 = vadd.f32 %v215, %v222
    %v226 = vadd.f32 %v216, %v222
    %v227 = vadd.f32 %v217, %v222
    %v228 = vmax.f32 %v224, 0.0
    %v229 = vmax.f32 %v225, 0.0
    %v230 = vmax.f32 %v226, 0.0
    %v231 = vmax.f32 %v227, 0.0
    %232 = vrot.lane.b32.xlu0 %v228, 1
    %v233 = vpop.permute.xlu0 %232
    %234 = vrot.lane.b32.xlu0 %v229, 1
    %v235 = vpop.permute.xlu0 %234
    %236 = vrot.lane.b32.xlu0 %v230, 1
    %v237 = vpop.permute.xlu0 %236
    %238 = vrot.lane.b32.xlu0 %v231, 1
    %v239 = vpop.permute.xlu0 %238
    %v240 = vsel %vm92, %v237, %v239
    %v241 = vsel %vm92, %v235, %v237
    %v242 = vsel %vm92, %v233, %v235
    %v243 = vsel %vm92, %v239, %v233
    %v244 = vsel %vm51, %v243, 0.0
    %v245 = vsel %vm51, %v242, 0.0
    %v246 = vsel %vm51, %v241, 0.0
    %v247 = vsel %vm51, %v240, 0.0
    %248 = vrot.lane.b32.xlu0 %v228, 127
    %v249 = vpop.permute.xlu0 %248
    %250 = vrot.lane.b32.xlu0 %v229, 127
    %v251 = vpop.permute.xlu0 %250
    %252 = vrot.lane.b32.xlu0 %v230, 127
    %v253 = vpop.permute.xlu0 %252
    %254 = vrot.lane.b32.xlu0 %v231, 127
    %v255 = vpop.permute.xlu0 %254
    %v256 = vsel %vm52, %v253, %v255
    %v257 = vsel %vm52, %v251, %v253
    %v258 = vsel %vm52, %v249, %v251
    %v259 = vsel %vm52, %v255, %v249
    %v260 = vsel %vm52, %v258, 0.0
    %v261 = vsel %vm52, %v257, 0.0
    %v262 = vsel %vm52, %v256, 0.0
    %v263 = vsel %vm52, %v259, 0.0
    %v264 = vld [vmem:[%s7] sm:$0xff]
    %v265 = vld [vmem:[%s8] sm:$0xff]
    %267 = vset.pattern.permute.xlu0 0
    %268 = vperm.xlu0 %267, %v265
    %v269 = vpop.permute.xlu0 %268
    %v272 = vsel %vm124, %v264, 0
    %274 = vmatpush.msra.mxu0 0.0
    %275 = vmatpush.msra.mxu0 0.0
    %276 = vmatpush.msra.mxu0 0.0
    %277 = vmatpush.msra.mxu0 0.0
    %278 = vmatpush.msra.mxu0 0.0
    %279 = vmatpush.msra.mxu0 0.0
    %280 = vmatpush.msra.mxu0 0.0
    %281 = vmatpush.msra.mxu0 0.0
    %282 = vmatpush.msra.mxu0 0.0
    %283 = vmatpush.msra.mxu0 0.0
    %284 = vmatpush.msra.mxu0 0.0
    %285 = vmatpush.msra.mxu0 0.0
    %286 = vmatpush.msra.mxu0 0.0
    %287 = vmatpush.msra.mxu0 %v260
    %288 = vmatpush.msra.mxu0 %v228
    %289 = vmatpush.msra.mxu0 %v244
    %290 = vmatmul.f32.gmra.mxu0 %v272
    %v291 = vpop.f32.mrf.mxu0
    %v292 = vadd.f32 %v269, %v291
    %293 = vdwg.mxu0
    %294 = vmatpush.msra.mxu0 0.0
    %295 = vmatpush.msra.mxu0 0.0
    %296 = vmatpush.msra.mxu0 0.0
    %297 = vmatpush.msra.mxu0 0.0
    %298 = vmatpush.msra.mxu0 0.0
    %299 = vmatpush.msra.mxu0 0.0
    %300 = vmatpush.msra.mxu0 0.0
    %301 = vmatpush.msra.mxu0 0.0
    %302 = vmatpush.msra.mxu0 0.0
    %303 = vmatpush.msra.mxu0 0.0
    %304 = vmatpush.msra.mxu0 0.0
    %305 = vmatpush.msra.mxu0 0.0
    %306 = vmatpush.msra.mxu0 0.0
    %307 = vmatpush.msra.mxu0 %v261
    %308 = vmatpush.msra.mxu0 %v229
    %309 = vmatpush.msra.mxu0 %v245
    %310 = vmatmul.f32.gmra.mxu0 %v272
    %v311 = vpop.f32.mrf.mxu0
    %v312 = vadd.f32 %v269, %v311
    %313 = vdwg.mxu0
    %314 = vmatpush.msra.mxu0 0.0
    %315 = vmatpush.msra.mxu0 0.0
    %316 = vmatpush.msra.mxu0 0.0
    %317 = vmatpush.msra.mxu0 0.0
    %318 = vmatpush.msra.mxu0 0.0
    %319 = vmatpush.msra.mxu0 0.0
    %320 = vmatpush.msra.mxu0 0.0
    %321 = vmatpush.msra.mxu0 0.0
    %322 = vmatpush.msra.mxu0 0.0
    %323 = vmatpush.msra.mxu0 0.0
    %324 = vmatpush.msra.mxu0 0.0
    %325 = vmatpush.msra.mxu0 0.0
    %326 = vmatpush.msra.mxu0 0.0
    %327 = vmatpush.msra.mxu0 %v262
    %328 = vmatpush.msra.mxu0 %v230
    %329 = vmatpush.msra.mxu0 %v246
    %330 = vmatmul.f32.gmra.mxu0 %v272
    %v331 = vpop.f32.mrf.mxu0
    %v332 = vadd.f32 %v269, %v331
    %333 = vdwg.mxu0
    %334 = vmatpush.msra.mxu0 0.0
    %335 = vmatpush.msra.mxu0 0.0
    %336 = vmatpush.msra.mxu0 0.0
    %337 = vmatpush.msra.mxu0 0.0
    %338 = vmatpush.msra.mxu0 0.0
    %339 = vmatpush.msra.mxu0 0.0
    %340 = vmatpush.msra.mxu0 0.0
    %341 = vmatpush.msra.mxu0 0.0
    %342 = vmatpush.msra.mxu0 0.0
    %343 = vmatpush.msra.mxu0 0.0
    %344 = vmatpush.msra.mxu0 0.0
    %345 = vmatpush.msra.mxu0 0.0
    %346 = vmatpush.msra.mxu0 0.0
    %347 = vmatpush.msra.mxu0 %v263
    %348 = vmatpush.msra.mxu0 %v231
    %349 = vmatpush.msra.mxu0 %v247
    %350 = vmatmul.f32.gmra.mxu0 %v272
    %v351 = vpop.f32.mrf.mxu0
    %v352 = vadd.f32 %v269, %v351
    %353 = vdwg.mxu0
    %v354 = vadd.f32 %v53, %v292
    %v355 = vadd.f32 %v55, %v312
    %v356 = vadd.f32 %v57, %v332
    %v357 = vadd.f32 %v59, %v352
    %358 = vst [vmem:[#allocation5] sm:$0xff] %v354
    %s359 = scalar_lea.vmem [#allocation5], 8
    %360 = vst [vmem:[%s359] sm:$0xff] %v355
    %s361 = scalar_lea.vmem [#allocation5], 16
    %362 = vst [vmem:[%s361] sm:$0xff] %v356
    %s363 = scalar_lea.vmem [#allocation5], 24
    %364 = vst [vmem:[%s363] sm:$0xff] %v357
    // Predicated region
    $region42: #{tpu_custom_call.1} parent=1 // pred_check
      _
    $region43: #{tpu_custom_call.1} parent=1 // pred_check_branch
      %366 = sbr.rel (0) target = $region45
    $region44: #{tpu_custom_call.1} parent=1 // pred_region
      %368 = vsyncadd [#allocation4], 0
      %s369 = sshll.u32 [#allocation5], 4
      %s370 = int_to_ptr.vmem [resolvable:$true] %s369
      %s371 = sshll.u32 %s9, 4
      %s372 = int_to_ptr.hbm [resolvable:$true] %s371
      %377 = dma.vmem_to_hbm [thread:$0]  %s370, 512, %s372, [#allocation4], 128, 128, 8
    $region45: #{tpu_custom_call.1} parent=1 // pred_fallthru
      _
    // Predicated region
    $region46: #{tpu_custom_call.1} parent=1 // pred_check
      _
    $region47: #{tpu_custom_call.1} parent=1 // pred_check_branch
      %379 = sbr.rel (0) target = $region49
    $region48: #{tpu_custom_call.1} parent=1 // pred_region
      %381 = dma.done [#allocation4], 512
    $region49: #{tpu_custom_call.1} parent=1 // pred_fallthru
      _
    %382 = vsyncpa [#allocation3], 1
    %383 = vsyncpa [#allocation4], 1

</llo_original>
